<compile_context>
chip_gen: v7x
topology: tpu7x:2x2x1
jax: 0.10.0
libtpu: 0.0.40
codegen_flags: <defaults>
</compile_context>

<pallas_src>
import jax
import jax.numpy as jnp
from jax.experimental import pallas as pl
from jax.experimental.pallas import tpu as pltpu

N, D = 16, 32   # nodes, logical feature dim (d = in_dim = out_dim everywhere)
DP = 128        # lane-padded feature dim (fills the 128-lane vreg axis)


def _pad_lanes(a, width=DP):
    return jnp.pad(a, ((0, 0), (0, width - a.shape[-1])))


def _pad_mat(w, width=DP):
    d0, d1 = w.shape
    return jnp.pad(w, ((0, width - d0), (0, width - d1)))


# ----------------------------------------------------------- fused forward ---
def _bgrl_fused_kernel(x_ref, perb_ref, adj_ref,
                       w_on_ref, b_on_ref, w_tg_ref, b_tg_ref,
                       w1_ref, b1_ref, bn_scale_ref, bn_shift_ref,
                       alpha_ref, w2_ref, b2_ref,
                       embed_ref, loss_ref):
    n = x_ref.shape[0]
    x1 = x_ref[...]
    x2 = x1 + perb_ref[...]

    adj = adj_ref[...]
    # adj @ (x @ W) == (adj @ x) @ W.  One small adj-dot per view (no lane
    # concats), then a sublane-tile-aligned row stack (n is a multiple of 8) so
    # both encoders run as single (2n, DP) @ (DP, DP) MXU calls over both views.
    z1 = jnp.dot(adj, x1, preferred_element_type=jnp.float32)
    z2 = jnp.dot(adj, x2, preferred_element_type=jnp.float32)
    zs = jnp.concatenate([z1, z2], axis=0)                      # (2n, DP)

    online = jnp.dot(zs, w_on_ref[...], preferred_element_type=jnp.float32) + b_on_ref[...]
    target = jnp.dot(zs, w_tg_ref[...], preferred_element_type=jnp.float32) + b_tg_ref[...]

    # embed = x2 + online_encoder(x2); lane-dense (n, 128) store (unmasked vst).
    embed_ref[...] = x2 + online[n:, :]

    # ---- MLP predictor on both online views at once (2n, DP) ----------------
    h = jnp.dot(online, w1_ref[...], preferred_element_type=jnp.float32) + b1_ref[...]
    h = h * bn_scale_ref[...] + bn_shift_ref[...]               # folded eval BatchNorm1d
    a = alpha_ref[0]                                            # PReLU (shared scalar)
    h = jnp.where(h > 0, h, a * h)
    p = jnp.dot(h, w2_ref[...], preferred_element_type=jnp.float32) + b2_ref[...]

    # ---- loss: pair on row halves (tile-aligned static slices, no concat) ---
    #   pred(on(x1)) <-> tgt(x2)   and   pred(on(x2)) <-> tgt(x1)
    def _cos(u, v):
        uv = jnp.sum(u * v, axis=-1, keepdims=True)
        uu = jnp.sum(u * u, axis=-1, keepdims=True)
        vv = jnp.sum(v * v, axis=-1, keepdims=True)
        # F.normalize clamps the norm at 1e-12  <=>  clamp squared norm at 1e-24
        return uv * jax.lax.rsqrt(jnp.maximum(uu, 1e-24)) \
                  * jax.lax.rsqrt(jnp.maximum(vv, 1e-24))

    cos_a = _cos(p[:n, :], target[n:, :])
    cos_b = _cos(p[n:, :], target[:n, :])
    # (loss_fn + loss_fn).mean() over n rows
    loss_ref[0, 0] = jnp.sum((2.0 - 2.0 * cos_a) + (2.0 - 2.0 * cos_b)) / n


def bgrl_fused(kp, x, adj, perb):
    n, d = x.shape
    xp = _pad_lanes(x)
    pb = _pad_lanes(perb)
    vmem = pl.BlockSpec(memory_space=pltpu.MemorySpace.VMEM)
    smem = pl.BlockSpec(memory_space=pltpu.MemorySpace.SMEM)
    embed, loss = pl.pallas_call(
        _bgrl_fused_kernel,
        out_shape=(jax.ShapeDtypeStruct((n, DP), jnp.float32),
                   jax.ShapeDtypeStruct((1, 1), jnp.float32)),
        in_specs=[vmem, vmem, vmem,                 # x, perb, adj
                  vmem, vmem, vmem, vmem,           # W_on, b_on, W_tg, b_tg
                  vmem, vmem, vmem, vmem,           # w1, b1, bn_scale, bn_shift
                  smem,                             # prelu alpha (scalar)
                  vmem, vmem],                      # w2, b2
        out_specs=(vmem, smem),
    )(xp, pb, adj,
      kp["w_online"], kp["b_online"], kp["w_target"], kp["b_target"],
      kp["w1"], kp["b1"], kp["bn_scale"], kp["bn_shift"], kp["alpha"],
      kp["w2"], kp["b2"])
    return embed[:, :d], loss[0, 0]


# ------------------------------------------------- perb=None branch kernel ---
def _gcn_residual_kernel(x_ref, adj_ref, w_ref, b_ref, o_ref):
    # out = x + adj @ (x @ W) + b  ==  x + (adj @ x) @ W + b
    x = x_ref[...]
    z = jnp.dot(adj_ref[...], x, preferred_element_type=jnp.float32)
    o_ref[...] = x + jnp.dot(z, w_ref[...], preferred_element_type=jnp.float32) + b_ref[...]


def gcn_residual(kp, x, adj):
    n, d = x.shape
    xp = _pad_lanes(x)
    vmem = pl.BlockSpec(memory_space=pltpu.MemorySpace.VMEM)
    out = pl.pallas_call(
        _gcn_residual_kernel,
        out_shape=jax.ShapeDtypeStruct((n, DP), jnp.float32),
        in_specs=[vmem, vmem, vmem, vmem],
        out_specs=vmem,
    )(xp, adj, kp["w_online"], kp["b_online"])
    return out[:, :d]


# ------------------------------------------------------------- parameters ----
def init_params(key, d):
    ks = jax.random.split(key, 5)
    # GCNConv online encoder: xavier_uniform_ W, zeros b
    limit = (6.0 / (d + d)) ** 0.5
    w_online = jax.random.uniform(ks[0], (d, d), jnp.float32, -limit, limit)
    b_online = jnp.zeros((1, d), jnp.float32)
    # target encoder = deepcopy(online encoder)
    w_target, b_target = w_online, b_online
    # MLP_Predictor linears (stored (in, out)); PyTorch-style uniform bounds
    bound = 1.0 / (d ** 0.5)
    w1 = jax.random.uniform(ks[1], (d, d), jnp.float32, -bound, bound)
    b1 = jax.random.uniform(ks[2], (1, d), jnp.float32, -bound, bound)
    w2 = jax.random.uniform(ks[3], (d, d), jnp.float32, -bound, bound)
    b2 = jax.random.uniform(ks[4], (1, d), jnp.float32, -bound, bound)
    return dict(
        w_online=w_online, b_online=b_online,
        w_target=w_target, b_target=b_target,
        w1=w1, b1=b1, w2=w2, b2=b2,
        gamma=jnp.ones((1, d), jnp.float32), beta=jnp.zeros((1, d), jnp.float32),
        rmean=jnp.zeros((1, d), jnp.float32), rvar=jnp.ones((1, d), jnp.float32),
        alpha=jnp.full((1,), 0.25, jnp.float32),
    )


def prepare_kernel_params(params):
    """One-time prep: fold eval BatchNorm and zero-pad the feature dim to DP.

    Zero-padding keeps the first d output columns bit-identical (padded rows of
    every weight are 0, padded bias/shift entries are 0), so results only need
    to be sliced back to (n, d).
    """
    bn_scale = params["gamma"] * jax.lax.rsqrt(params["rvar"] + 1e-5)
    bn_shift = params["beta"] - params["rmean"] * bn_scale
    return dict(
        w_online=_pad_mat(params["w_online"]), b_online=_pad_lanes(params["b_online"]),
        w_target=_pad_mat(params["w_target"]), b_target=_pad_lanes(params["b_target"]),
        w1=_pad_mat(params["w1"]), b1=_pad_lanes(params["b1"]),
        w2=_pad_mat(params["w2"]), b2=_pad_lanes(params["b2"]),
        bn_scale=_pad_lanes(bn_scale), bn_shift=_pad_lanes(bn_shift),
        alpha=params["alpha"],
    )


# ------------------------------------------------------------ BGRL forward ---
def bgrl_forward(kparams, x, adj, perb=None):
    if perb is None:
        return gcn_residual(kparams, x, adj), jnp.asarray(0.0, jnp.float32)
    # target-encoder outputs are detached in torch; forward values are identical.
    return bgrl_fused(kparams, x, adj, perb)


# ------------------------------------------------------- pure-JAX reference --
def _reference(params, x, adj, perb):
    hp = jax.lax.Precision.HIGHEST

    def gcn(xx, w, b):
        return jnp.matmul(adj, jnp.matmul(xx, w, precision=hp), precision=hp) + b

    def pred(xx):
        h = jnp.matmul(xx, params["w1"], precision=hp) + params["b1"]
        h = (h - params["rmean"]) * jax.lax.rsqrt(params["rvar"] + 1e-5) \
            * params["gamma"] + params["beta"]
        h = jnp.where(h > 0, h, params["alpha"][0] * h)
        return jnp.matmul(h, params["w2"], precision=hp) + params["b2"]

    def lfn(a, b):
        an = a / jnp.maximum(jnp.linalg.norm(a, axis=-1, keepdims=True), 1e-12)
        bn = b / jnp.maximum(jnp.linalg.norm(b, axis=-1, keepdims=True), 1e-12)
        return 2.0 - 2.0 * jnp.sum(an * bn, axis=-1)

    x1, x2 = x, x + perb
    embed = x2 + gcn(x2, params["w_online"], params["b_online"])
    ox = pred(gcn(x1, params["w_online"], params["b_online"]))
    oy = pred(gcn(x2, params["w_online"], params["b_online"]))
    ty = gcn(x1, params["w_target"], params["b_target"])
    tx = gcn(x2, params["w_target"], params["b_target"])
    loss = jnp.mean(lfn(ox, tx) + lfn(oy, ty))
    return embed, loss


# ----------------------------------------------------------------- main ------
if __name__ == "__main__":
    key = jax.random.PRNGKey(0)
    kx, kp_, ka, kw = jax.random.split(key, 4)

    x = jax.random.normal(kx, (N, D), jnp.float32)
    perb = 0.1 * jax.random.normal(kp_, (N, D), jnp.float32)

    # deterministic dense "sparse" adjacency: random symmetric + self loops, row-normalized
    a = (jax.random.uniform(ka, (N, N)) > 0.7).astype(jnp.float32)
    a = jnp.maximum(a, a.T) + jnp.eye(N, dtype=jnp.float32)
    adj = a / jnp.sum(a, axis=1, keepdims=True)

    params = init_params(kw, D)
    kparams = prepare_kernel_params(params)   # pad + BN-fold once, reused every step

    embed, loss = bgrl_forward(kparams, x, adj, perb)   # perb branch (fused kernel)
    out0, loss0 = bgrl_forward(kparams, x, adj, None)   # perb is None branch
    jax.block_until_ready((embed, loss, out0, loss0))

    assert embed.shape == (N, D) and out0.shape == (N, D)
    assert loss.shape == () and loss0.shape == ()

    # correctness vs pure-JAX reference
    ref_embed, ref_loss = _reference(params, x, adj, perb)
    assert jnp.allclose(embed, ref_embed, atol=1e-3, rtol=1e-3), "embed mismatch"
    assert abs(float(loss) - float(ref_loss)) < 1e-3, "loss mismatch"

    ref_out0 = x + jnp.matmul(adj, jnp.matmul(x, params["w_online"])) + params["b_online"]
    assert jnp.allclose(out0, ref_out0, atol=1e-3, rtol=1e-3), "residual mismatch"

    print("KERNEL_OK")
</pallas_src>

<mosaic_0001>
module attributes {stable_mosaic.version = 11 : i64} {
  func.func @_bgrl_fused_kernel(%arg0: memref<16x128xf32, #tpu.memory_space<vmem>>, %arg1: memref<16x128xf32, #tpu.memory_space<vmem>>, %arg2: memref<16x16xf32, #tpu.memory_space<vmem>>, %arg3: memref<128x128xf32, #tpu.memory_space<vmem>>, %arg4: memref<1x128xf32, #tpu.memory_space<vmem>>, %arg5: memref<128x128xf32, #tpu.memory_space<vmem>>, %arg6: memref<1x128xf32, #tpu.memory_space<vmem>>, %arg7: memref<128x128xf32, #tpu.memory_space<vmem>>, %arg8: memref<1x128xf32, #tpu.memory_space<vmem>>, %arg9: memref<1x128xf32, #tpu.memory_space<vmem>>, %arg10: memref<1x128xf32, #tpu.memory_space<vmem>>, %arg11: memref<1xf32, #tpu.memory_space<smem>>, %arg12: memref<128x128xf32, #tpu.memory_space<vmem>>, %arg13: memref<1x128xf32, #tpu.memory_space<vmem>>, %arg14: memref<16x128xf32, #tpu.memory_space<vmem>>, %arg15: memref<1x1xf32, #tpu.memory_space<smem>>) attributes {dimension_semantics = [], scalar_prefetch = 0 : i64, scratch_operands = 0 : i64, tpu.core_type = #tpu.core_type<tc>} {
    %c0 = arith.constant 0 : index
    %c0_0 = arith.constant 0 : index
    %0 = vector.load %arg0[%c0, %c0_0] : memref<16x128xf32, #tpu.memory_space<vmem>>, vector<16x128xf32>
    %c0_1 = arith.constant 0 : index
    %c0_2 = arith.constant 0 : index
    %1 = vector.load %arg1[%c0_1, %c0_2] : memref<16x128xf32, #tpu.memory_space<vmem>>, vector<16x128xf32>
    %2 = arith.addf %0, %1 : vector<16x128xf32>
    %c0_3 = arith.constant 0 : index
    %c0_4 = arith.constant 0 : index
    %3 = vector.load %arg2[%c0_3, %c0_4] : memref<16x16xf32, #tpu.memory_space<vmem>>, vector<16x16xf32>
    %cst = arith.constant dense<0.000000e+00> : vector<16x128xf32>
    %4 = tpu.matmul %3, %0, %cst {dimension_numbers = #tpu.dot_dimension_numbers<[1], [0], [0], [1], [0, 0, 1, 1], [], []>} : vector<16x16xf32>, vector<16x128xf32>, vector<16x128xf32> -> vector<16x128xf32>
    %cst_5 = arith.constant dense<0.000000e+00> : vector<16x128xf32>
    %5 = tpu.matmul %3, %2, %cst_5 {dimension_numbers = #tpu.dot_dimension_numbers<[1], [0], [0], [1], [0, 0, 1, 1], [], []>} : vector<16x16xf32>, vector<16x128xf32>, vector<16x128xf32> -> vector<16x128xf32>
    %6 = tpu.concatenate %4, %5 in 0 : vector<16x128xf32>, vector<16x128xf32> -> vector<32x128xf32>
    %c0_6 = arith.constant 0 : index
    %c0_7 = arith.constant 0 : index
    %7 = vector.load %arg3[%c0_6, %c0_7] : memref<128x128xf32, #tpu.memory_space<vmem>>, vector<128x128xf32>
    %cst_8 = arith.constant dense<0.000000e+00> : vector<32x128xf32>
    %8 = tpu.matmul %6, %7, %cst_8 {dimension_numbers = #tpu.dot_dimension_numbers<[1], [0], [0], [1], [0, 0, 1, 1], [], []>} : vector<32x128xf32>, vector<128x128xf32>, vector<32x128xf32> -> vector<32x128xf32>
    %c0_9 = arith.constant 0 : index
    %c0_10 = arith.constant 0 : index
    %9 = vector.load %arg4[%c0_9, %c0_10] : memref<1x128xf32, #tpu.memory_space<vmem>>, vector<1x128xf32>
    %10 = vector.broadcast %9 : vector<1x128xf32> to vector<32x128xf32>
    %11 = arith.addf %8, %10 : vector<32x128xf32>
    %c0_11 = arith.constant 0 : index
    %c0_12 = arith.constant 0 : index
    %12 = vector.load %arg5[%c0_11, %c0_12] : memref<128x128xf32, #tpu.memory_space<vmem>>, vector<128x128xf32>
    %cst_13 = arith.constant dense<0.000000e+00> : vector<32x128xf32>
    %13 = tpu.matmul %6, %12, %cst_13 {dimension_numbers = #tpu.dot_dimension_numbers<[1], [0], [0], [1], [0, 0, 1, 1], [], []>} : vector<32x128xf32>, vector<128x128xf32>, vector<32x128xf32> -> vector<32x128xf32>
    %c0_14 = arith.constant 0 : index
    %c0_15 = arith.constant 0 : index
    %14 = vector.load %arg6[%c0_14, %c0_15] : memref<1x128xf32, #tpu.memory_space<vmem>>, vector<1x128xf32>
    %15 = vector.broadcast %14 : vector<1x128xf32> to vector<32x128xf32>
    %16 = arith.addf %13, %15 : vector<32x128xf32>
    %17 = vector.extract_strided_slice %11 {offsets = [16, 0], sizes = [16, 128], strides = [1, 1]} : vector<32x128xf32> to vector<16x128xf32>
    %18 = arith.addf %2, %17 : vector<16x128xf32>
    %c0_16 = arith.constant 0 : index
    %c0_17 = arith.constant 0 : index
    %19 = vector.load %arg14[%c0_16, %c0_17] : memref<16x128xf32, #tpu.memory_space<vmem>>, vector<16x128xf32>
    tpu.vector_store %arg14[%c0_16, %c0_17], %18 {strides = array<i32>} : memref<16x128xf32, #tpu.memory_space<vmem>>, vector<16x128xf32>,
    %c0_18 = arith.constant 0 : index
    %c0_19 = arith.constant 0 : index
    %20 = vector.load %arg7[%c0_18, %c0_19] : memref<128x128xf32, #tpu.memory_space<vmem>>, vector<128x128xf32>
    %cst_20 = arith.constant dense<0.000000e+00> : vector<32x128xf32>
    %21 = tpu.matmul %11, %20, %cst_20 {dimension_numbers = #tpu.dot_dimension_numbers<[1], [0], [0], [1], [0, 0, 1, 1], [], []>} : vector<32x128xf32>, vector<128x128xf32>, vector<32x128xf32> -> vector<32x128xf32>
    %c0_21 = arith.constant 0 : index
    %c0_22 = arith.constant 0 : index
    %22 = vector.load %arg8[%c0_21, %c0_22] : memref<1x128xf32, #tpu.memory_space<vmem>>, vector<1x128xf32>
    %23 = vector.broadcast %22 : vector<1x128xf32> to vector<32x128xf32>
    %24 = arith.addf %21, %23 : vector<32x128xf32>
    %c0_23 = arith.constant 0 : index
    %c0_24 = arith.constant 0 : index
    %25 = vector.load %arg9[%c0_23, %c0_24] : memref<1x128xf32, #tpu.memory_space<vmem>>, vector<1x128xf32>
    %26 = vector.broadcast %25 : vector<1x128xf32> to vector<32x128xf32>
    %27 = arith.mulf %24, %26 : vector<32x128xf32>
    %c0_25 = arith.constant 0 : index
    %c0_26 = arith.constant 0 : index
    %28 = vector.load %arg10[%c0_25, %c0_26] : memref<1x128xf32, #tpu.memory_space<vmem>>, vector<1x128xf32>
    %29 = vector.broadcast %28 : vector<1x128xf32> to vector<32x128xf32>
    %30 = arith.addf %27, %29 : vector<32x128xf32>
    %c0_27 = arith.constant 0 : index
    %31 = memref.load %arg11[%c0_27] : memref<1xf32, #tpu.memory_space<smem>>
    %cst_28 = arith.constant 0.000000e+00 : f32
    %32 = vector.broadcast %cst_28 : f32 to vector<32x128xf32>
    %33 = arith.cmpf ogt, %30, %32 : vector<32x128xf32>
    %34 = vector.broadcast %31 : f32 to vector<32x128xf32>
    %35 = arith.mulf %34, %30 : vector<32x128xf32>
    %36 = arith.select %33, %30, %35 : vector<32x128xi1>, vector<32x128xf32>
    %c0_29 = arith.constant 0 : index
    %c0_30 = arith.constant 0 : index
    %37 = vector.load %arg12[%c0_29, %c0_30] : memref<128x128xf32, #tpu.memory_space<vmem>>, vector<128x128xf32>
    %cst_31 = arith.constant dense<0.000000e+00> : vector<32x128xf32>
    %38 = tpu.matmul %36, %37, %cst_31 {dimension_numbers = #tpu.dot_dimension_numbers<[1], [0], [0], [1], [0, 0, 1, 1], [], []>} : vector<32x128xf32>, vector<128x128xf32>, vector<32x128xf32> -> vector<32x128xf32>
    %c0_32 = arith.constant 0 : index
    %c0_33 = arith.constant 0 : index
    %39 = vector.load %arg13[%c0_32, %c0_33] : memref<1x128xf32, #tpu.memory_space<vmem>>, vector<1x128xf32>
    %40 = vector.broadcast %39 : vector<1x128xf32> to vector<32x128xf32>
    %41 = arith.addf %38, %40 : vector<32x128xf32>
    %42 = vector.extract_strided_slice %41 {offsets = [0, 0], sizes = [16, 128], strides = [1, 1]} : vector<32x128xf32> to vector<16x128xf32>
    %43 = vector.extract_strided_slice %16 {offsets = [16, 0], sizes = [16, 128], strides = [1, 1]} : vector<32x128xf32> to vector<16x128xf32>
    %44 = arith.mulf %42, %43 : vector<16x128xf32>
    %cst_34 = arith.constant dense<0.000000e+00> : vector<16xf32>
    %45 = vector.multi_reduction <add>, %44, %cst_34 [1] : vector<16x128xf32> to vector<16xf32>
    %46 = vector.shape_cast %45 : vector<16xf32> to vector<16x1xf32>
    %47 = arith.mulf %42, %42 : vector<16x128xf32>
    %cst_35 = arith.constant dense<0.000000e+00> : vector<16xf32>
    %48 = vector.multi_reduction <add>, %47, %cst_35 [1] : vector<16x128xf32> to vector<16xf32>
    %49 = vector.shape_cast %48 : vector<16xf32> to vector<16x1xf32>
    %50 = arith.mulf %43, %43 : vector<16x128xf32>
    %cst_36 = arith.constant dense<0.000000e+00> : vector<16xf32>
    %51 = vector.multi_reduction <add>, %50, %cst_36 [1] : vector<16x128xf32> to vector<16xf32>
    %52 = vector.shape_cast %51 : vector<16xf32> to vector<16x1xf32>
    %cst_37 = arith.constant 1.000000e-24 : f32
    %53 = vector.broadcast %cst_37 : f32 to vector<16x1xf32>
    %54 = arith.maximumf %49, %53 : vector<16x1xf32>
    %55 = math.rsqrt %54 : vector<16x1xf32>
    %56 = arith.mulf %46, %55 : vector<16x1xf32>
    %cst_38 = arith.constant 1.000000e-24 : f32
    %57 = vector.broadcast %cst_38 : f32 to vector<16x1xf32>
    %58 = arith.maximumf %52, %57 : vector<16x1xf32>
    %59 = math.rsqrt %58 : vector<16x1xf32>
    %60 = arith.mulf %56, %59 : vector<16x1xf32>
    %61 = vector.extract_strided_slice %41 {offsets = [16, 0], sizes = [16, 128], strides = [1, 1]} : vector<32x128xf32> to vector<16x128xf32>
    %62 = vector.extract_strided_slice %16 {offsets = [0, 0], sizes = [16, 128], strides = [1, 1]} : vector<32x128xf32> to vector<16x128xf32>
    %63 = arith.mulf %61, %62 : vector<16x128xf32>
    %cst_39 = arith.constant dense<0.000000e+00> : vector<16xf32>
    %64 = vector.multi_reduction <add>, %63, %cst_39 [1] : vector<16x128xf32> to vector<16xf32>
    %65 = vector.shape_cast %64 : vector<16xf32> to vector<16x1xf32>
    %66 = arith.mulf %61, %61 : vector<16x128xf32>
    %cst_40 = arith.constant dense<0.000000e+00> : vector<16xf32>
    %67 = vector.multi_reduction <add>, %66, %cst_40 [1] : vector<16x128xf32> to vector<16xf32>
    %68 = vector.shape_cast %67 : vector<16xf32> to vector<16x1xf32>
    %69 = arith.mulf %62, %62 : vector<16x128xf32>
    %cst_41 = arith.constant dense<0.000000e+00> : vector<16xf32>
    %70 = vector.multi_reduction <add>, %69, %cst_41 [1] : vector<16x128xf32> to vector<16xf32>
    %71 = vector.shape_cast %70 : vector<16xf32> to vector<16x1xf32>
    %cst_42 = arith.constant 1.000000e-24 : f32
    %72 = vector.broadcast %cst_42 : f32 to vector<16x1xf32>
    %73 = arith.maximumf %68, %72 : vector<16x1xf32>
    %74 = math.rsqrt %73 : vector<16x1xf32>
    %75 = arith.mulf %65, %74 : vector<16x1xf32>
    %cst_43 = arith.constant 1.000000e-24 : f32
    %76 = vector.broadcast %cst_43 : f32 to vector<16x1xf32>
    %77 = arith.maximumf %71, %76 : vector<16x1xf32>
    %78 = math.rsqrt %77 : vector<16x1xf32>
    %79 = arith.mulf %75, %78 : vector<16x1xf32>
    %cst_44 = arith.constant 2.000000e+00 : f32
    %80 = vector.broadcast %cst_44 : f32 to vector<16x1xf32>
    %81 = arith.mulf %80, %60 : vector<16x1xf32>
    %cst_45 = arith.constant 2.000000e+00 : f32
    %82 = vector.broadcast %cst_45 : f32 to vector<16x1xf32>
    %83 = arith.subf %82, %81 : vector<16x1xf32>
    %cst_46 = arith.constant 2.000000e+00 : f32
    %84 = vector.broadcast %cst_46 : f32 to vector<16x1xf32>
    %85 = arith.mulf %84, %79 : vector<16x1xf32>
    %cst_47 = arith.constant 2.000000e+00 : f32
    %86 = vector.broadcast %cst_47 : f32 to vector<16x1xf32>
    %87 = arith.subf %86, %85 : vector<16x1xf32>
    %88 = arith.addf %83, %87 : vector<16x1xf32>
    %89 = vector.shape_cast %88 : vector<16x1xf32> to vector<1x16x1xf32>
    %cst_48 = arith.constant dense<0.000000e+00> : vector<1xf32>
    %90 = vector.multi_reduction <add>, %89, %cst_48 [1, 2] : vector<1x16x1xf32> to vector<1xf32>
    %91 = vector.shape_cast %90 : vector<1xf32> to vector<1x1x1xf32>
    %92 = vector.extract %91[0, 0, 0] : f32 from vector<1x1x1xf32>
    %cst_49 = arith.constant 1.600000e+01 : f32
    %93 = arith.divf %92, %cst_49 : f32
    %c0_50 = arith.constant 0 : index
    %c0_51 = arith.constant 0 : index
    %94 = memref.load %arg15[%c0_50, %c0_51] : memref<1x1xf32, #tpu.memory_space<smem>>
    memref.store %93, %arg15[%c0_50, %c0_51] : memref<1x1xf32, #tpu.memory_space<smem>>
    return
  }
}

</mosaic_0001>

<llo_original>
// kernel: tpu_custom_call.1
$region0: #{tpu_custom_call.1}
  #allocation0 [shape = 'u32[]', space=smem, size = 0x4, offset = 0x4, fixed_abs, tag = 'smem constant byte address 0x4 - core index']
  #allocation1 [shape = 'u32[144,128]{1,0:T(1,128)}', space=vmem, size = 0x12000, scoped, tag = 'internal scratch']
  #allocation2 [shape = 'f32[1]{0:T(128)S(6)}', space=smem, size = 0x200, scoped, tag = 'scoped memory for tpu_custom_call.1']
  %s0 = inlined_call_operand.hbm [shape: f32[16,128], index: 0, kind: input, shape index: {}]
  %s1 = inlined_call_operand.hbm [shape: f32[16,128], index: 1, kind: input, shape index: {}]
  %s2 = inlined_call_operand.hbm [shape: f32[16,16], index: 2, kind: input, shape index: {}]
  %s3 = inlined_call_operand.hbm [shape: f32[128,128], index: 3, kind: input, shape index: {}]
  %s4 = inlined_call_operand.vmem [shape: f32[1,128], index: 4, kind: input, shape index: {}]
  %s5 = inlined_call_operand.hbm [shape: f32[128,128], index: 5, kind: input, shape index: {}]
  %s6 = inlined_call_operand.vmem [shape: f32[1,128], index: 6, kind: input, shape index: {}]
  %s7 = inlined_call_operand.hbm [shape: f32[128,128], index: 7, kind: input, shape index: {}]
  %s8 = inlined_call_operand.vmem [shape: f32[1,128], index: 8, kind: input, shape index: {}]
  %s9 = inlined_call_operand.vmem [shape: f32[1,128], index: 9, kind: input, shape index: {}]
  %s10 = inlined_call_operand.vmem [shape: f32[1,128], index: 10, kind: input, shape index: {}]
  %s11 = inlined_call_operand.<no memory space> [shape: f32[1], index: 11, kind: input, shape index: {}]
  %s12 = inlined_call_operand.hbm [shape: f32[128,128], index: 12, kind: input, shape index: {}]
  %s13 = inlined_call_operand.vmem [shape: f32[1,128], index: 13, kind: input, shape index: {}]
  %s14 = inlined_call_operand.hbm [shape: f32[16,128], index: 14, kind: output, shape index: {0}]
  %s15 = inlined_call_operand.hbm [shape: f32[1,1], index: 15, kind: output, shape index: {1}]
  %16 = xla_tuple %s14, %s15
  %s17 = sld [smem:[#allocation0]]
  $region102: #{tpu_custom_call.1} parent=0
    _
  %s19 = ssub.s32 1, %s17
  %s20 = scalar_select 0, %s19, %s17
  %21 = sst [smem:[#allocation2]] %s11
  $region1: #{tpu_custom_call.1} parent=0
    #allocation3 [shape = 'u8[8192]{0}', space=vmem, size = 0x2000, scoped, tag = 'input window, operand 0, single buffered']
    #allocation4 [shape = 's32[1]{0}', space=sflag, size = 0x4, scoped, tag = 'scoped memory for tpu_custom_call.1']
    #allocation5 [shape = 's32[1]{0}', space=sflag, size = 0x4, scoped, tag = 'scoped memory for tpu_custom_call.1']
    #allocation6 [shape = 's32[1]{0}', space=sflag, size = 0x4, scoped, tag = 'scoped memory for tpu_custom_call.1']
    #allocation7 [shape = 'u8[8192]{0}', space=vmem, size = 0x2000, scoped, tag = 'input window, operand 1, single buffered']
    #allocation8 [shape = 's32[1]{0}', space=sflag, size = 0x4, scoped, tag = 'scoped memory for tpu_custom_call.1']
    #allocation9 [shape = 'u8[8192]{0}', space=vmem, size = 0x2000, scoped, tag = 'input window, operand 2, single buffered']
    #allocation10 [shape = 'u8[65536]{0}', space=vmem, size = 0x10000, scoped, tag = 'input window, operand 3, single buffered']
    #allocation11 [shape = 's32[1]{0}', space=sflag, size = 0x4, scoped, tag = 'scoped memory for tpu_custom_call.1']
    #allocation12 [shape = 'u8[65536]{0}', space=vmem, size = 0x10000, scoped, tag = 'input window, operand 5, single buffered']
    #allocation13 [shape = 'u8[65536]{0}', space=vmem, size = 0x10000, scoped, tag = 'input window, operand 7, single buffered']
    #allocation14 [shape = 's32[1]{0}', space=sflag, size = 0x4, scoped, tag = 'scoped memory for tpu_custom_call.1']
    #allocation15 [shape = 'u8[65536]{0}', space=vmem, size = 0x10000, scoped, tag = 'input window, operand 12, single buffered']
    #allocation16 [shape = 'u8[8192]{0}', space=vmem, size = 0x2000, scoped, tag = 'output window, operand 0, single buffered']
    #allocation17 [shape = 'u8[512]{0}', space=smem, size = 0x200, scoped, tag = 'output window, operand 1, single buffered']
    %22 = vsyncpa [#allocation4], 0
    %23 = vsyncpa [#allocation8], 0
    %24 = vsyncpa [#allocation11], 0
    %25 = vsyncpa [#allocation14], 0
    %26 = vsyncpa [#allocation5], 0
    %27 = vsyncpa [#allocation6], 0
    // Predicated region
    $region2: #{tpu_custom_call.1} parent=1 // pred_check
      _
    $region3: #{tpu_custom_call.1} parent=1 // pred_check_branch
      %29 = sbr.rel (0) target = $region5
    $region4: #{tpu_custom_call.1} parent=1 // pred_region
      %s31 = ssub.s32 256, 256
      %32 = vsyncadd [#allocation4], %s31
      %s33 = sshll.u32 [#allocation3], 4
      %s34 = int_to_ptr.vmem [resolvable:$true] %s33
      %39 = dma.hbm_to_vmem [thread:$0]  %s0, 256, %s34, [#allocation4], 128, 128, 8
    $region5: #{tpu_custom_call.1} parent=1 // pred_fallthru
      _
    // Predicated region
    $region6: #{tpu_custom_call.1} parent=1 // pred_check
      _
    $region7: #{tpu_custom_call.1} parent=1 // pred_check_branch
      %41 = sbr.rel (0) target = $region9
    $region8: #{tpu_custom_call.1} parent=1 // pred_region
      %s43 = ssub.s32 256, 256
      %44 = vsyncadd [#allocation8], %s43
      %s45 = sshll.u32 [#allocation7], 4
      %s46 = int_to_ptr.vmem [resolvable:$true] %s45
      %51 = dma.hbm_to_vmem [thread:$0]  %s1, 256, %s46, [#allocation8], 128, 128, 8
    $region9: #{tpu_custom_call.1} parent=1 // pred_fallthru
      _
    // Predicated region
    $region10: #{tpu_custom_call.1} parent=1 // pred_check
      _
    $region11: #{tpu_custom_call.1} parent=1 // pred_check_branch
      %53 = sbr.rel (0) target = $region13
    $region12: #{tpu_custom_call.1} parent=1 // pred_region
      %s55 = ssub.s32 256, 256
      %56 = vsyncadd [#allocation8], %s55
      %s57 = sshll.u32 [#allocation9], 4
      %s58 = int_to_ptr.vmem [resolvable:$true] %s57
      %63 = dma.hbm_to_vmem [thread:$0]  %s2, 256, %s58, [#allocation8], 128, 128, 8
    $region13: #{tpu_custom_call.1} parent=1 // pred_fallthru
      _
    // Predicated region
    $region14: #{tpu_custom_call.1} parent=1 // pred_check
      _
    $region15: #{tpu_custom_call.1} parent=1 // pred_check_branch
      %65 = sbr.rel (0) target = $region17
    $region16: #{tpu_custom_call.1} parent=1 // pred_region
      %s67 = ssub.s32 2048, 2048
      %68 = vsyncadd [#allocation11], %s67
      %s69 = sshll.u32 [#allocation10], 4
      %s70 = int_to_ptr.vmem [resolvable:$true] %s69
      %75 = dma.hbm_to_vmem [thread:$0]  %s3, 2048, %s70, [#allocation11], 128, 128, 8
    $region17: #{tpu_custom_call.1} parent=1 // pred_fallthru
      _
    // Predicated region
    $region18: #{tpu_custom_call.1} parent=1 // pred_check
      _
    $region19: #{tpu_custom_call.1} parent=1 // pred_check_branch
      %77 = sbr.rel (0) target = $region21
    $region20: #{tpu_custom_call.1} parent=1 // pred_region
      _
    $region21: #{tpu_custom_call.1} parent=1 // pred_fallthru
      _
    // Predicated region
    $region22: #{tpu_custom_call.1} parent=1 // pred_check
      _
    $region23: #{tpu_custom_call.1} parent=1 // pred_check_branch
      %79 = sbr.rel (0) target = $region25
    $region24: #{tpu_custom_call.1} parent=1 // pred_region
      %s81 = ssub.s32 2048, 2048
      %82 = vsyncadd [#allocation11], %s81
      %s83 = sshll.u32 [#allocation12], 4
      %s84 = int_to_ptr.vmem [resolvable:$true] %s83
      %89 = dma.hbm_to_vmem [thread:$0]  %s5, 2048, %s84, [#allocation11], 128, 128, 8
    $region25: #{tpu_custom_call.1} parent=1 // pred_fallthru
      _
    // Predicated region
    $region26: #{tpu_custom_call.1} parent=1 // pred_check
      _
    $region27: #{tpu_custom_call.1} parent=1 // pred_check_branch
      %91 = sbr.rel (0) target = $region29
    $region28: #{tpu_custom_call.1} parent=1 // pred_region
      _
    $region29: #{tpu_custom_call.1} parent=1 // pred_fallthru
      _
    // Predicated region
    $region30: #{tpu_custom_call.1} parent=1 // pred_check
      _
    $region31: #{tpu_custom_call.1} parent=1 // pred_check_branch
      %93 = sbr.rel (0) target = $region33
    $region32: #{tpu_custom_call.1} parent=1 // pred_region
      %s95 = ssub.s32 2048, 2048
      %96 = vsyncadd [#allocation14], %s95
      %s97 = sshll.u32 [#allocation13], 4
      %s98 = int_to_ptr.vmem [resolvable:$true] %s97
      %103 = dma.hbm_to_vmem [thread:$0]  %s7, 2048, %s98, [#allocation14], 128, 128, 8
    $region33: #{tpu_custom_call.1} parent=1 // pred_fallthru
      _
    // Predicated region
    $region34: #{tpu_custom_call.1} parent=1 // pred_check
      _
    $region35: #{tpu_custom_call.1} parent=1 // pred_check_branch
      %105 = sbr.rel (0) target = $region37
    $region36: #{tpu_custom_call.1} parent=1 // pred_region
      _
    $region37: #{tpu_custom_call.1} parent=1 // pred_fallthru
      _
    // Predicated region
    $region38: #{tpu_custom_call.1} parent=1 // pred_check
      _
    $region39: #{tpu_custom_call.1} parent=1 // pred_check_branch
      %107 = sbr.rel (0) target = $region41
    $region40: #{tpu_custom_call.1} parent=1 // pred_region
      _
    $region41: #{tpu_custom_call.1} parent=1 // pred_fallthru
      _
    // Predicated region
    $region42: #{tpu_custom_call.1} parent=1 // pred_check
      _
    $region43: #{tpu_custom_call.1} parent=1 // pred_check_branch
      %109 = sbr.rel (0) target = $region45
    $region44: #{tpu_custom_call.1} parent=1 // pred_region
      _
    $region45: #{tpu_custom_call.1} parent=1 // pred_fallthru
      _
    // Predicated region
    $region46: #{tpu_custom_call.1} parent=1 // pred_check
      _
    $region47: #{tpu_custom_call.1} parent=1 // pred_check_branch
      %111 = sbr.rel (0) target = $region49
    $region48: #{tpu_custom_call.1} parent=1 // pred_region
      _
    $region49: #{tpu_custom_call.1} parent=1 // pred_fallthru
      _
    // Predicated region
    $region50: #{tpu_custom_call.1} parent=1 // pred_check
      _
    $region51: #{tpu_custom_call.1} parent=1 // pred_check_branch
      %113 = sbr.rel (0) target = $region53
    $region52: #{tpu_custom_call.1} parent=1 // pred_region
      %s115 = ssub.s32 2048, 2048
      %116 = vsyncadd [#allocation14], %s115
      %s117 = sshll.u32 [#allocation15], 4
      %s118 = int_to_ptr.vmem [resolvable:$true] %s117
      %123 = dma.hbm_to_vmem [thread:$0]  %s12, 2048, %s118, [#allocation14], 128, 128, 8
    $region53: #{tpu_custom_call.1} parent=1 // pred_fallthru
      _
    // Predicated region
    $region54: #{tpu_custom_call.1} parent=1 // pred_check
      _
    $region55: #{tpu_custom_call.1} parent=1 // pred_check_branch
      %125 = sbr.rel (0) target = $region57
    $region56: #{tpu_custom_call.1} parent=1 // pred_region
      _
    $region57: #{tpu_custom_call.1} parent=1 // pred_fallthru
      _
    // Predicated region
    $region58: #{tpu_custom_call.1} parent=1 // pred_check
      _
    $region59: #{tpu_custom_call.1} parent=1 // pred_check_branch
      %127 = sbr.rel (0) target = $region61
    $region60: #{tpu_custom_call.1} parent=1 // pred_region
      %128 = dma.done [#allocation4], 256
    $region61: #{tpu_custom_call.1} parent=1 // pred_fallthru
      _
    // Predicated region
    $region62: #{tpu_custom_call.1} parent=1 // pred_check
      _
    $region63: #{tpu_custom_call.1} parent=1 // pred_check_branch
      %130 = sbr.rel (0) target = $region65
    $region64: #{tpu_custom_call.1} parent=1 // pred_region
      %131 = dma.done [#allocation8], 256
    $region65: #{tpu_custom_call.1} parent=1 // pred_fallthru
      _
    // Predicated region
    $region66: #{tpu_custom_call.1} parent=1 // pred_check
      _
    $region67: #{tpu_custom_call.1} parent=1 // pred_check_branch
      %133 = sbr.rel (0) target = $region69
    $region68: #{tpu_custom_call.1} parent=1 // pred_region
      %134 = dma.done [#allocation8], 256
    $region69: #{tpu_custom_call.1} parent=1 // pred_fallthru
      _
    // Predicated region
    $region70: #{tpu_custom_call.1} parent=1 // pred_check
      _
    $region71: #{tpu_custom_call.1} parent=1 // pred_check_branch
      %136 = sbr.rel (0) target = $region73
    $region72: #{tpu_custom_call.1} parent=1 // pred_region
      %137 = dma.done [#allocation11], 2048
    $region73: #{tpu_custom_call.1} parent=1 // pred_fallthru
      _
    // Predicated region
    $region74: #{tpu_custom_call.1} parent=1 // pred_check
      _
    $region75: #{tpu_custom_call.1} parent=1 // pred_check_branch
      %139 = sbr.rel (0) target = $region77
    $region76: #{tpu_custom_call.1} parent=1 // pred_region
      %140 = dma.done [#allocation11], 2048
    $region77: #{tpu_custom_call.1} parent=1 // pred_fallthru
      _
    // Predicated region
    $region78: #{tpu_custom_call.1} parent=1 // pred_check
      _
    $region79: #{tpu_custom_call.1} parent=1 // pred_check_branch
      %142 = sbr.rel (0) target = $region81
    $region80: #{tpu_custom_call.1} parent=1 // pred_region
      %143 = dma.done [#allocation14], 2048
    $region81: #{tpu_custom_call.1} parent=1 // pred_fallthru
      _
    // Predicated region
    $region82: #{tpu_custom_call.1} parent=1 // pred_check
      _
    $region83: #{tpu_custom_call.1} parent=1 // pred_check_branch
      %145 = sbr.rel (0) target = $region85
    $region84: #{tpu_custom_call.1} parent=1 // pred_region
      %146 = dma.done [#allocation14], 2048
    $region85: #{tpu_custom_call.1} parent=1 // pred_fallthru
      _
    %v147 = vld [vmem:[#allocation3] sm:$0xff]
    %v148 = vld [vmem:[#allocation3 + $0x8] sm:$0xff]
    %v149 = vld [vmem:[#allocation7] sm:$0xff]
    %v150 = vld [vmem:[#allocation7 + $0x8] sm:$0xff]
    %v151 = vadd.f32 %v147, %v149
    %v152 = vadd.f32 %v148, %v150
    %v153 = vld [vmem:[#allocation9] sm:$0xff]
    %v154 = vld [vmem:[#allocation9 + $0x8] sm:$0xff]
    %vm155 = vcmask 130048
    %v157 = vsel %vm155, %v153, 0
    %v160 = vsel %vm155, %v154, 0
    %162 = vmatprep.subr.mxu0 0.0
    %163 = vmatpush1.msra.mxu0 %v147
    %164 = vmatprep.subr.mxu0 0.0
    %165 = vmatpush1.msra.mxu0 %v148
    %166 = vmatprep.subr.mxu0 0.0
    %167 = vmatpush1.msra.mxu0 0.0
    %168 = vmatprep.subr.mxu0 0.0
    %169 = vmatpush1.msra.mxu0 0.0
    %170 = vmatprep.subr.mxu0 0.0
    %171 = vmatpush1.msra.mxu0 0.0
    %172 = vmatprep.subr.mxu0 0.0
    %173 = vmatpush1.msra.mxu0 0.0
    %174 = vmatprep.subr.mxu0 0.0
    %175 = vmatpush1.msra.mxu0 0.0
    %176 = vmatprep.subr.mxu0 0.0
    %177 = vmatpush1.msra.mxu0 0.0
    %178 = vmatprep.subr.mxu0 0.0
    %179 = vmatpush1.msra.mxu0 0.0
    %180 = vmatprep.subr.mxu0 0.0
    %181 = vmatpush1.msra.mxu0 0.0
    %182 = vmatprep.subr.mxu0 0.0
    %183 = vmatpush1.msra.mxu0 0.0
    %184 = vmatprep.subr.mxu0 0.0
    %185 = vmatpush1.msra.mxu0 0.0
    %186 = vmatprep.subr.mxu0 0.0
    %187 = vmatpush1.msra.mxu0 0.0
    %188 = vmatprep.subr.mxu0 0.0
    %189 = vmatpush1.msra.mxu0 0.0
    %190 = vmatprep.subr.mxu0 0.0
    %191 = vmatpush1.msra.mxu0 0.0
    %192 = vmatprep.subr.mxu0 0.0
    %193 = vmatpush1.msra.mxu0 0.0
    %194 = vmatprep.subr.mxu0 0.0
    %195 = vmatpush1.msra.mxu0 0.0
    %196 = vmatprep.subr.mxu0 0.0
    %197 = vmatpush1.msra.mxu0 0.0
    %198 = vmatprep.subr.mxu0 0.0
    %199 = vmatpush1.msra.mxu0 0.0
    %200 = vmatprep.subr.mxu0 0.0
    %201 = vmatpush1.msra.mxu0 0.0
    %202 = vmatprep.subr.mxu0 0.0
    %203 = vmatpush1.msra.mxu0 0.0
    %204 = vmatprep.subr.mxu0 0.0
    %205 = vmatpush1.msra.mxu0 0.0
    %206 = vmatprep.subr.mxu0 0.0
    %207 = vmatpush1.msra.mxu0 0.0
    %208 = vmatprep.subr.mxu0 0.0
    %209 = vmatpush1.msra.mxu0 0.0
    %210 = vmatprep.subr.mxu0 0.0
    %211 = vmatpush1.msra.mxu0 0.0
    %212 = vmatprep.subr.mxu0 0.0
    %213 = vmatpush1.msra.mxu0 0.0
    %214 = vmatprep.subr.mxu0 0.0
    %215 = vmatpush1.msra.mxu0 0.0
    %216 = vmatprep.subr.mxu0 0.0
    %217 = vmatpush1.msra.mxu0 0.0
    %218 = vmatprep.subr.mxu0 0.0
    %219 = vmatpush1.msra.mxu0 0.0
    %220 = vmatprep.subr.mxu0 0.0
    %221 = vmatpush1.msra.mxu0 0.0
    %222 = vmatprep.subr.mxu0 0.0
    %223 = vmatpush1.msra.mxu0 0.0
    %224 = vmatprep.subr.mxu0 0.0
    %225 = vmatpush1.msra.mxu0 0.0
    %226 = vmatprep.mubr.f32.mxu0 0.0
    %227 = vmatmul.mubr.f32.gmra.mrb[0].mxu0 %v157
    %v228 = vpop.f32.mrb[0].mxu0
    %v229 = vadd.f32 0.0, %v228
    %v230 = vpop.f32.mrb[0].mxu0
    %231 = vmatprep.mubr.f32.mxu0 0.0
    %232 = vmatmul.mubr.f32.gmra.mrb[0].mxu0 %v160
    %v233 = vpop.f32.mrb[0].mxu0
    %v234 = vadd.f32 0.0, %v233
    %v235 = vpop.f32.mrb[0].mxu0
    %236 = vdwg.mxu0
    %237 = vmatprep.subr.mxu0 0.0
    %238 = vmatpush1.msra.mxu0 %v151
    %239 = vmatprep.subr.mxu0 0.0
    %240 = vmatpush1.msra.mxu0 %v152
    %241 = vmatprep.subr.mxu0 0.0
    %242 = vmatpush1.msra.mxu0 0.0
    %243 = vmatprep.subr.mxu0 0.0
    %244 = vmatpush1.msra.mxu0 0.0
    %245 = vmatprep.subr.mxu0 0.0
    %246 = vmatpush1.msra.mxu0 0.0
    %247 = vmatprep.subr.mxu0 0.0
    %248 = vmatpush1.msra.mxu0 0.0
    %249 = vmatprep.subr.mxu0 0.0
    %250 = vmatpush1.msra.mxu0 0.0
    %251 = vmatprep.subr.mxu0 0.0
    %252 = vmatpush1.msra.mxu0 0.0
    %253 = vmatprep.subr.mxu0 0.0
    %254 = vmatpush1.msra.mxu0 0.0
    %255 = vmatprep.subr.mxu0 0.0
    %256 = vmatpush1.msra.mxu0 0.0
    %257 = vmatprep.subr.mxu0 0.0
    %258 = vmatpush1.msra.mxu0 0.0
    %259 = vmatprep.subr.mxu0 0.0
    %260 = vmatpush1.msra.mxu0 0.0
    %261 = vmatprep.subr.mxu0 0.0
    %262 = vmatpush1.msra.mxu0 0.0
    %263 = vmatprep.subr.mxu0 0.0
    %264 = vmatpush1.msra.mxu0 0.0
    %265 = vmatprep.subr.mxu0 0.0
    %266 = vmatpush1.msra.mxu0 0.0
    %267 = vmatprep.subr.mxu0 0.0
    %268 = vmatpush1.msra.mxu0 0.0
    %269 = vmatprep.subr.mxu0 0.0
    %270 = vmatpush1.msra.mxu0 0.0
    %271 = vmatprep.subr.mxu0 0.0
    %272 = vmatpush1.msra.mxu0 0.0
    %273 = vmatprep.subr.mxu0 0.0
    %274 = vmatpush1.msra.mxu0 0.0
    %275 = vmatprep.subr.mxu0 0.0
    %276 = vmatpush1.msra.mxu0 0.0
    %277 = vmatprep.subr.mxu0 0.0
    %278 = vmatpush1.msra.mxu0 0.0
    %279 = vmatprep.subr.mxu0 0.0
    %280 = vmatpush1.msra.mxu0 0.0
    %281 = vmatprep.subr.mxu0 0.0
    %282 = vmatpush1.msra.mxu0 0.0
    %283 = vmatprep.subr.mxu0 0.0
    %284 = vmatpush1.msra.mxu0 0.0
    %285 = vmatprep.subr.mxu0 0.0
    %286 = vmatpush1.msra.mxu0 0.0
    %287 = vmatprep.subr.mxu0 0.0
    %288 = vmatpush1.msra.mxu0 0.0
    %289 = vmatprep.subr.mxu0 0.0
    %290 = vmatpush1.msra.mxu0 0.0
    %291 = vmatprep.subr.mxu0 0.0
    %292 = vmatpush1.msra.mxu0 0.0
    %293 = vmatprep.subr.mxu0 0.0
    %294 = vmatpush1.msra.mxu0 0.0
    %295 = vmatprep.subr.mxu0 0.0
    %296 = vmatpush1.msra.mxu0 0.0
    %297 = vmatprep.subr.mxu0 0.0
    %298 = vmatpush1.msra.mxu0 0.0
    %299 = vmatprep.subr.mxu0 0.0
    %300 = vmatpush1.msra.mxu0 0.0
    %301 = vmatprep.mubr.f32.mxu0 0.0
    %302 = vmatmul.mubr.f32.gmra.mrb[0].mxu0 %v157
    %v303 = vpop.f32.mrb[0].mxu0
    %v304 = vadd.f32 0.0, %v303
    %v305 = vpop.f32.mrb[0].mxu0
    %306 = vmatprep.mubr.f32.mxu0 0.0
    %307 = vmatmul.mubr.f32.gmra.mrb[0].mxu0 %v160
    %v308 = vpop.f32.mrb[0].mxu0
    %v309 = vadd.f32 0.0, %v308
    %v310 = vpop.f32.mrb[0].mxu0
    %311 = vdwg.mxu0
    %v312 = vld [vmem:[#allocation10] sm:$0xff]
    %v313 = vld [vmem:[#allocation10 + $0x8] sm:$0xff]
    %v314 = vld [vmem:[#allocation10 + $0x10] sm:$0xff]
    %v315 = vld [vmem:[#allocation10 + $0x18] sm:$0xff]
    %v316 = vld [vmem:[#allocation10 + $0x20] sm:$0xff]
    %v317 = vld [vmem:[#allocation10 + $0x28] sm:$0xff]
    %v318 = vld [vmem:[#allocation10 + $0x30] sm:$0xff]
    %v319 = vld [vmem:[#allocation10 + $0x38] sm:$0xff]
    %v320 = vld [vmem:[#allocation10 + $0x40] sm:$0xff]
    %v321 = vld [vmem:[#allocation10 + $0x48] sm:$0xff]
    %v322 = vld [vmem:[#allocation10 + $0x50] sm:$0xff]
    %v323 = vld [vmem:[#allocation10 + $0x58] sm:$0xff]
    %v324 = vld [vmem:[#allocation10 + $0x60] sm:$0xff]
    %v325 = vld [vmem:[#allocation10 + $0x68] sm:$0xff]
    %v326 = vld [vmem:[#allocation10 + $0x70] sm:$0xff]
    %v327 = vld [vmem:[#allocation10 + $0x78] sm:$0xff]
    %v328 = vld [vmem:[%s4] sm:$0x1]
    %v330 = vlaneseq
    %v331 = vshrl.u32 %v330, 7
    %v332 = vsub.s32 0, %v331
    %v333 = vrot.slane %v328, %v332
    %335 = vmatprep.subr.mxu0 0.0
    %336 = vmatpush1.msra.mxu0 %v312
    %337 = vmatprep.subr.mxu0 0.0
    %338 = vmatpush1.msra.mxu0 %v313
    %339 = vmatprep.subr.mxu0 0.0
    %340 = vmatpush1.msra.mxu0 %v314
    %341 = vmatprep.subr.mxu0 0.0
    %342 = vmatpush1.msra.mxu0 %v315
    %343 = vmatprep.subr.mxu0 0.0
    %344 = vmatpush1.msra.mxu0 %v316
    %345 = vmatprep.subr.mxu0 0.0
    %346 = vmatpush1.msra.mxu0 %v317
    %347 = vmatprep.subr.mxu0 0.0
    %348 = vmatpush1.msra.mxu0 %v318
    %349 = vmatprep.subr.mxu0 0.0
    %350 = vmatpush1.msra.mxu0 %v319
    %351 = vmatprep.subr.mxu0 0.0
    %352 = vmatpush1.msra.mxu0 %v320
    %353 = vmatprep.subr.mxu0 0.0
    %354 = vmatpush1.msra.mxu0 %v321
    %355 = vmatprep.subr.mxu0 0.0
    %356 = vmatpush1.msra.mxu0 %v322
    %357 = vmatprep.subr.mxu0 0.0
    %358 = vmatpush1.msra.mxu0 %v323
    %359 = vmatprep.subr.mxu0 0.0
    %360 = vmatpush1.msra.mxu0 %v324
    %361 = vmatprep.subr.mxu0 0.0
    %362 = vmatpush1.msra.mxu0 %v325
    %363 = vmatprep.subr.mxu0 0.0
    %364 = vmatpush1.msra.mxu0 %v326
    %365 = vmatprep.subr.mxu0 0.0
    %366 = vmatpush1.msra.mxu0 %v327
    %367 = vmatprep.subr.mxu0 0.0
    %368 = vmatpush1.msra.mxu0 0.0
    %369 = vmatprep.subr.mxu0 0.0
    %370 = vmatpush1.msra.mxu0 0.0
    %371 = vmatprep.subr.mxu0 0.0
    %372 = vmatpush1.msra.mxu0 0.0
    %373 = vmatprep.subr.mxu0 0.0
    %374 = vmatpush1.msra.mxu0 0.0
    %375 = vmatprep.subr.mxu0 0.0
    %376 = vmatpush1.msra.mxu0 0.0
    %377 = vmatprep.subr.mxu0 0.0
    %378 = vmatpush1.msra.mxu0 0.0
    %379 = vmatprep.subr.mxu0 0.0
    %380 = vmatpush1.msra.mxu0 0.0
    %381 = vmatprep.subr.mxu0 0.0
    %382 = vmatpush1.msra.mxu0 0.0
    %383 = vmatprep.subr.mxu0 0.0
    %384 = vmatpush1.msra.mxu0 0.0
    %385 = vmatprep.subr.mxu0 0.0
    %386 = vmatpush1.msra.mxu0 0.0
    %387 = vmatprep.subr.mxu0 0.0
    %388 = vmatpush1.msra.mxu0 0.0
    %389 = vmatprep.subr.mxu0 0.0
    %390 = vmatpush1.msra.mxu0 0.0
    %391 = vmatprep.subr.mxu0 0.0
    %392 = vmatpush1.msra.mxu0 0.0
    %393 = vmatprep.subr.mxu0 0.0
    %394 = vmatpush1.msra.mxu0 0.0
    %395 = vmatprep.subr.mxu0 0.0
    %396 = vmatpush1.msra.mxu0 0.0
    %397 = vmatprep.subr.mxu0 0.0
    %398 = vmatpush1.msra.mxu0 0.0
    %399 = vmatprep.mubr.f32.mxu0 0.0
    %400 = vmatmul.mubr.f32.gmra.mrb[0].mxu0 %v229
    %v401 = vpop.f32.mrb[0].mxu0
    %v402 = vadd.f32 %v333, %v401
    %v403 = vpop.f32.mrb[0].mxu0
    %404 = vmatprep.mubr.f32.mxu0 0.0
    %405 = vmatmul.mubr.f32.gmra.mrb[0].mxu0 %v234
    %v406 = vpop.f32.mrb[0].mxu0
    %v407 = vadd.f32 %v333, %v406
    %v408 = vpop.f32.mrb[0].mxu0
    %409 = vmatprep.mubr.f32.mxu0 0.0
    %410 = vmatmul.mubr.f32.gmra.mrb[0].mxu0 %v304
    %v411 = vpop.f32.mrb[0].mxu0
    %v412 = vadd.f32 %v333, %v411
    %v413 = vpop.f32.mrb[0].mxu0
    %414 = vmatprep.mubr.f32.mxu0 0.0
    %415 = vmatmul.mubr.f32.gmra.mrb[0].mxu0 %v309
    %v416 = vpop.f32.mrb[0].mxu0
    %v417 = vadd.f32 %v333, %v416
    %v418 = vpop.f32.mrb[0].mxu0
    %419 = vdwg.mxu0
    %v420 = vld [vmem:[#allocation12] sm:$0xff]
    %v421 = vld [vmem:[#allocation12 + $0x8] sm:$0xff]
    %v422 = vld [vmem:[#allocation12 + $0x10] sm:$0xff]
    %v423 = vld [vmem:[#allocation12 + $0x18] sm:$0xff]
    %v424 = vld [vmem:[#allocation12 + $0x20] sm:$0xff]
    %v425 = vld [vmem:[#allocation12 + $0x28] sm:$0xff]
    %v426 = vld [vmem:[#allocation12 + $0x30] sm:$0xff]
    %v427 = vld [vmem:[#allocation12 + $0x38] sm:$0xff]
    %v428 = vld [vmem:[#allocation12 + $0x40] sm:$0xff]
    %v429 = vld [vmem:[#allocation12 + $0x48] sm:$0xff]
    %v430 = vld [vmem:[#allocation12 + $0x50] sm:$0xff]
    %v431 = vld [vmem:[#allocation12 + $0x58] sm:$0xff]
    %v432 = vld [vmem:[#allocation12 + $0x60] sm:$0xff]
    %v433 = vld [vmem:[#allocation12 + $0x68] sm:$0xff]
    %v434 = vld [vmem:[#allocation12 + $0x70] sm:$0xff]
    %v435 = vld [vmem:[#allocation12 + $0x78] sm:$0xff]
    %v436 = vld [vmem:[%s6] sm:$0x1]
    %v438 = vlaneseq
    %v439 = vshrl.u32 %v438, 7
    %v440 = vsub.s32 0, %v439
    %v441 = vrot.slane %v436, %v440
    %443 = vmatprep.subr.mxu0 0.0
    %444 = vmatpush1.msra.mxu0 %v420
    %445 = vmatprep.subr.mxu0 0.0
    %446 = vmatpush1.msra.mxu0 %v421
    %447 = vmatprep.subr.mxu0 0.0
    %448 = vmatpush1.msra.mxu0 %v422
    %449 = vmatprep.subr.mxu0 0.0
    %450 = vmatpush1.msra.mxu0 %v423
    %451 = vmatprep.subr.mxu0 0.0
    %452 = vmatpush1.msra.mxu0 %v424
    %453 = vmatprep.subr.mxu0 0.0
    %454 = vmatpush1.msra.mxu0 %v425
    %455 = vmatprep.subr.mxu0 0.0
    %456 = vmatpush1.msra.mxu0 %v426
    %457 = vmatprep.subr.mxu0 0.0
    %458 = vmatpush1.msra.mxu0 %v427
    %459 = vmatprep.subr.mxu0 0.0
    %460 = vmatpush1.msra.mxu0 %v428
    %461 = vmatprep.subr.mxu0 0.0
    %462 = vmatpush1.msra.mxu0 %v429
    %463 = vmatprep.subr.mxu0 0.0
    %464 = vmatpush1.msra.mxu0 %v430
    %465 = vmatprep.subr.mxu0 0.0
    %466 = vmatpush1.msra.mxu0 %v431
    %467 = vmatprep.subr.mxu0 0.0
    %468 = vmatpush1.msra.mxu0 %v432
    %469 = vmatprep.subr.mxu0 0.0
    %470 = vmatpush1.msra.mxu0 %v433
    %471 = vmatprep.subr.mxu0 0.0
    %472 = vmatpush1.msra.mxu0 %v434
    %473 = vmatprep.subr.mxu0 0.0
    %474 = vmatpush1.msra.mxu0 %v435
    %475 = vmatprep.subr.mxu0 0.0
    %476 = vmatpush1.msra.mxu0 0.0
    %477 = vmatprep.subr.mxu0 0.0
    %478 = vmatpush1.msra.mxu0 0.0
    %479 = vmatprep.subr.mxu0 0.0
    %480 = vmatpush1.msra.mxu0 0.0
    %481 = vmatprep.subr.mxu0 0.0
    %482 = vmatpush1.msra.mxu0 0.0
    %483 = vmatprep.subr.mxu0 0.0
    %484 = vmatpush1.msra.mxu0 0.0
    %485 = vmatprep.subr.mxu0 0.0
    %486 = vmatpush1.msra.mxu0 0.0
    %487 = vmatprep.subr.mxu0 0.0
    %488 = vmatpush1.msra.mxu0 0.0
    %489 = vmatprep.subr.mxu0 0.0
    %490 = vmatpush1.msra.mxu0 0.0
    %491 = vmatprep.subr.mxu0 0.0
    %492 = vmatpush1.msra.mxu0 0.0
    %493 = vmatprep.subr.mxu0 0.0
    %494 = vmatpush1.msra.mxu0 0.0
    %495 = vmatprep.subr.mxu0 0.0
    %496 = vmatpush1.msra.mxu0 0.0
    %497 = vmatprep.subr.mxu0 0.0
    %498 = vmatpush1.msra.mxu0 0.0
    %499 = vmatprep.subr.mxu0 0.0
    %500 = vmatpush1.msra.mxu0 0.0
    %501 = vmatprep.subr.mxu0 0.0
    %502 = vmatpush1.msra.mxu0 0.0
    %503 = vmatprep.subr.mxu0 0.0
    %504 = vmatpush1.msra.mxu0 0.0
    %505 = vmatprep.subr.mxu0 0.0
    %506 = vmatpush1.msra.mxu0 0.0
    %507 = vmatprep.mubr.f32.mxu0 0.0
    %508 = vmatmul.mubr.f32.gmra.mrb[0].mxu0 %v229
    %v509 = vpop.f32.mrb[0].mxu0
    %v510 = vadd.f32 %v441, %v509
    %v511 = vpop.f32.mrb[0].mxu0
    %512 = vmatprep.mubr.f32.mxu0 0.0
    %513 = vmatmul.mubr.f32.gmra.mrb[0].mxu0 %v234
    %v514 = vpop.f32.mrb[0].mxu0
    %v515 = vadd.f32 %v441, %v514
    %v516 = vpop.f32.mrb[0].mxu0
    %517 = vmatprep.mubr.f32.mxu0 0.0
    %518 = vmatmul.mubr.f32.gmra.mrb[0].mxu0 %v304
    %v519 = vpop.f32.mrb[0].mxu0
    %v520 = vadd.f32 %v441, %v519
    %v521 = vpop.f32.mrb[0].mxu0
    %522 = vmatprep.mubr.f32.mxu0 0.0
    %523 = vmatmul.mubr.f32.gmra.mrb[0].mxu0 %v309
    %v524 = vpop.f32.mrb[0].mxu0
    %v525 = vadd.f32 %v441, %v524
    %v526 = vpop.f32.mrb[0].mxu0
    %527 = vdwg.mxu0
    %v528 = vadd.f32 %v151, %v412
    %v529 = vadd.f32 %v152, %v417
    %530 = vst [vmem:[#allocation16] sm:$0xff] %v528
    %531 = vst [vmem:[#allocation16 + $0x8] sm:$0xff] %v529
    %v532 = vld [vmem:[#allocation13] sm:$0xff]
    %v533 = vld [vmem:[#allocation13 + $0x8] sm:$0xff]
    %v534 = vld [vmem:[#allocation13 + $0x10] sm:$0xff]
    %v535 = vld [vmem:[#allocation13 + $0x18] sm:$0xff]
    %v536 = vld [vmem:[#allocation13 + $0x20] sm:$0xff]
    %v537 = vld [vmem:[#allocation13 + $0x28] sm:$0xff]
    %v538 = vld [vmem:[#allocation13 + $0x30] sm:$0xff]
    %v539 = vld [vmem:[#allocation13 + $0x38] sm:$0xff]
    %v540 = vld [vmem:[#allocation13 + $0x40] sm:$0xff]
    %v541 = vld [vmem:[#allocation13 + $0x48] sm:$0xff]
    %v542 = vld [vmem:[#allocation13 + $0x50] sm:$0xff]
    %v543 = vld [vmem:[#allocation13 + $0x58] sm:$0xff]
    %v544 = vld [vmem:[#allocation13 + $0x60] sm:$0xff]
    %v545 = vld [vmem:[#allocation13 + $0x68] sm:$0xff]
    %v546 = vld [vmem:[#allocation13 + $0x70] sm:$0xff]
    %v547 = vld [vmem:[#allocation13 + $0x78] sm:$0xff]
    %v548 = vld [vmem:[%s8] sm:$0x1]
    %v550 = vlaneseq
    %v551 = vshrl.u32 %v550, 7
    %v552 = vsub.s32 0, %v551
    %v553 = vrot.slane %v548, %v552
    %555 = vmatprep.subr.mxu0 0.0
    %556 = vmatpush1.msra.mxu0 %v532
    %557 = vmatprep.subr.mxu0 0.0
    %558 = vmatpush1.msra.mxu0 %v533
    %559 = vmatprep.subr.mxu0 0.0
    %560 = vmatpush1.msra.mxu0 %v534
    %561 = vmatprep.subr.mxu0 0.0
    %562 = vmatpush1.msra.mxu0 %v535
    %563 = vmatprep.subr.mxu0 0.0
    %564 = vmatpush1.msra.mxu0 %v536
    %565 = vmatprep.subr.mxu0 0.0
    %566 = vmatpush1.msra.mxu0 %v537
    %567 = vmatprep.subr.mxu0 0.0
    %568 = vmatpush1.msra.mxu0 %v538
    %569 = vmatprep.subr.mxu0 0.0
    %570 = vmatpush1.msra.mxu0 %v539
    %571 = vmatprep.subr.mxu0 0.0
    %572 = vmatpush1.msra.mxu0 %v540
    %573 = vmatprep.subr.mxu0 0.0
    %574 = vmatpush1.msra.mxu0 %v541
    %575 = vmatprep.subr.mxu0 0.0
    %576 = vmatpush1.msra.mxu0 %v542
    %577 = vmatprep.subr.mxu0 0.0
    %578 = vmatpush1.msra.mxu0 %v543
    %579 = vmatprep.subr.mxu0 0.0
    %580 = vmatpush1.msra.mxu0 %v544
    %581 = vmatprep.subr.mxu0 0.0
    %582 = vmatpush1.msra.mxu0 %v545
    %583 = vmatprep.subr.mxu0 0.0
    %584 = vmatpush1.msra.mxu0 %v546
    %585 = vmatprep.subr.mxu0 0.0
    %586 = vmatpush1.msra.mxu0 %v547
    %587 = vmatprep.subr.mxu0 0.0
    %588 = vmatpush1.msra.mxu0 0.0
    %589 = vmatprep.subr.mxu0 0.0
    %590 = vmatpush1.msra.mxu0 0.0
    %591 = vmatprep.subr.mxu0 0.0
    %592 = vmatpush1.msra.mxu0 0.0
    %593 = vmatprep.subr.mxu0 0.0
    %594 = vmatpush1.msra.mxu0 0.0
    %595 = vmatprep.subr.mxu0 0.0
    %596 = vmatpush1.msra.mxu0 0.0
    %597 = vmatprep.subr.mxu0 0.0
    %598 = vmatpush1.msra.mxu0 0.0
    %599 = vmatprep.subr.mxu0 0.0
    %600 = vmatpush1.msra.mxu0 0.0
    %601 = vmatprep.subr.mxu0 0.0
    %602 = vmatpush1.msra.mxu0 0.0
    %603 = vmatprep.subr.mxu0 0.0
    %604 = vmatpush1.msra.mxu0 0.0
    %605 = vmatprep.subr.mxu0 0.0
    %606 = vmatpush1.msra.mxu0 0.0
    %607 = vmatprep.subr.mxu0 0.0
    %608 = vmatpush1.msra.mxu0 0.0
    %609 = vmatprep.subr.mxu0 0.0
    %610 = vmatpush1.msra.mxu0 0.0
    %611 = vmatprep.subr.mxu0 0.0
    %612 = vmatpush1.msra.mxu0 0.0
    %613 = vmatprep.subr.mxu0 0.0
    %614 = vmatpush1.msra.mxu0 0.0
    %615 = vmatprep.subr.mxu0 0.0
    %616 = vmatpush1.msra.mxu0 0.0
    %617 = vmatprep.subr.mxu0 0.0
    %618 = vmatpush1.msra.mxu0 0.0
    %619 = vmatprep.mubr.f32.mxu0 0.0
    %620 = vmatmul.mubr.f32.gmra.mrb[0].mxu0 %v402
    %v621 = vpop.f32.mrb[0].mxu0
    %v622 = vadd.f32 %v553, %v621
    %v623 = vpop.f32.mrb[0].mxu0
    %624 = vmatprep.mubr.f32.mxu0 0.0
    %625 = vmatmul.mubr.f32.gmra.mrb[0].mxu0 %v407
    %v626 = vpop.f32.mrb[0].mxu0
    %v627 = vadd.f32 %v553, %v626
    %v628 = vpop.f32.mrb[0].mxu0
    %629 = vmatprep.mubr.f32.mxu0 0.0
    %630 = vmatmul.mubr.f32.gmra.mrb[0].mxu0 %v412
    %v631 = vpop.f32.mrb[0].mxu0
    %v632 = vadd.f32 %v553, %v631
    %v633 = vpop.f32.mrb[0].mxu0
    %634 = vmatprep.mubr.f32.mxu0 0.0
    %635 = vmatmul.mubr.f32.gmra.mrb[0].mxu0 %v417
    %v636 = vpop.f32.mrb[0].mxu0
    %v637 = vadd.f32 %v553, %v636
    %v638 = vpop.f32.mrb[0].mxu0
    %639 = vdwg.mxu0
    %v640 = vld [vmem:[%s9] sm:$0x1]
    %v642 = vlaneseq
    %v643 = vshrl.u32 %v642, 7
    %v644 = vsub.s32 0, %v643
    %v645 = vrot.slane %v640, %v644
    %v647 = vmul.f32 %v622, %v645
    %v648 = vmul.f32 %v627, %v645
    %v649 = vmul.f32 %v632, %v645
    %v650 = vmul.f32 %v637, %v645
    %v651 = vld [vmem:[%s10] sm:$0x1]
    %v653 = vlaneseq
    %v654 = vshrl.u32 %v653, 7
    %v655 = vsub.s32 0, %v654
    %v656 = vrot.slane %v651, %v655
    %v658 = vadd.f32 %v647, %v656
    %v659 = vadd.f32 %v648, %v656
    %v660 = vadd.f32 %v649, %v656
    %v661 = vadd.f32 %v650, %v656
    %s662 = sld [smem:[#allocation2]]
    %vm663 = vcmp.gt.f32.partialorder %v658, 0.0
    %vm664 = vcmp.gt.f32.partialorder %v659, 0.0
    %vm665 = vcmp.gt.f32.partialorder %v660, 0.0
    %vm666 = vcmp.gt.f32.partialorder %v661, 0.0
    %v667 = vstv %s662
    %v668 = vmul.f32 %v667, %v658
    %v669 = vmul.f32 %v667, %v659
    %v670 = vmul.f32 %v667, %v660
    %v671 = vmul.f32 %v667, %v661
    %v672 = vsel %vm663, %v658, %v668
    %v673 = vsel %vm664, %v659, %v669
    %v674 = vsel %vm665, %v660, %v670
    %v675 = vsel %vm666, %v661, %v671
    %v676 = vld [vmem:[#allocation15] sm:$0xff]
    %v677 = vld [vmem:[#allocation15 + $0x8] sm:$0xff]
    %v678 = vld [vmem:[#allocation15 + $0x10] sm:$0xff]
    %v679 = vld [vmem:[#allocation15 + $0x18] sm:$0xff]
    %v680 = vld [vmem:[#allocation15 + $0x20] sm:$0xff]
    %v681 = vld [vmem:[#allocation15 + $0x28] sm:$0xff]
    %v682 = vld [vmem:[#allocation15 + $0x30] sm:$0xff]
    %v683 = vld [vmem:[#allocation15 + $0x38] sm:$0xff]
    %v684 = vld [vmem:[#allocation15 + $0x40] sm:$0xff]
    %v685 = vld [vmem:[#allocation15 + $0x48] sm:$0xff]
    %v686 = vld [vmem:[#allocation15 + $0x50] sm:$0xff]
    %v687 = vld [vmem:[#allocation15 + $0x58] sm:$0xff]
    %v688 = vld [vmem:[#allocation15 + $0x60] sm:$0xff]
    %v689 = vld [vmem:[#allocation15 + $0x68] sm:$0xff]
    %v690 = vld [vmem:[#allocation15 + $0x70] sm:$0xff]
    %v691 = vld [vmem:[#allocation15 + $0x78] sm:$0xff]
    %v692 = vld [vmem:[%s13] sm:$0x1]
    %v694 = vlaneseq
    %v695 = vshrl.u32 %v694, 7
    %v696 = vsub.s32 0, %v695
    %v697 = vrot.slane %v692, %v696
    %699 = vmatprep.subr.mxu0 0.0
    %700 = vmatpush1.msra.mxu0 %v676
    %701 = vmatprep.subr.mxu0 0.0
    %702 = vmatpush1.msra.mxu0 %v677
    %703 = vmatprep.subr.mxu0 0.0
    %704 = vmatpush1.msra.mxu0 %v678
    %705 = vmatprep.subr.mxu0 0.0
    %706 = vmatpush1.msra.mxu0 %v679
    %707 = vmatprep.subr.mxu0 0.0
    %708 = vmatpush1.msra.mxu0 %v680
    %709 = vmatprep.subr.mxu0 0.0
    %710 = vmatpush1.msra.mxu0 %v681
    %711 = vmatprep.subr.mxu0 0.0
    %712 = vmatpush1.msra.mxu0 %v682
    %713 = vmatprep.subr.mxu0 0.0
    %714 = vmatpush1.msra.mxu0 %v683
    %715 = vmatprep.subr.mxu0 0.0
    %716 = vmatpush1.msra.mxu0 %v684
    %717 = vmatprep.subr.mxu0 0.0
    %718 = vmatpush1.msra.mxu0 %v685
    %719 = vmatprep.subr.mxu0 0.0
    %720 = vmatpush1.msra.mxu0 %v686
    %721 = vmatprep.subr.mxu0 0.0
    %722 = vmatpush1.msra.mxu0 %v687
    %723 = vmatprep.subr.mxu0 0.0
    %724 = vmatpush1.msra.mxu0 %v688
    %725 = vmatprep.subr.mxu0 0.0
    %726 = vmatpush1.msra.mxu0 %v689
    %727 = vmatprep.subr.mxu0 0.0
    %728 = vmatpush1.msra.mxu0 %v690
    %729 = vmatprep.subr.mxu0 0.0
    %730 = vmatpush1.msra.mxu0 %v691
    %731 = vmatprep.subr.mxu0 0.0
    %732 = vmatpush1.msra.mxu0 0.0
    %733 = vmatprep.subr.mxu0 0.0
    %734 = vmatpush1.msra.mxu0 0.0
    %735 = vmatprep.subr.mxu0 0.0
    %736 = vmatpush1.msra.mxu0 0.0
    %737 = vmatprep.subr.mxu0 0.0
    %738 = vmatpush1.msra.mxu0 0.0
    %739 = vmatprep.subr.mxu0 0.0
    %740 = vmatpush1.msra.mxu0 0.0
    %741 = vmatprep.subr.mxu0 0.0
    %742 = vmatpush1.msra.mxu0 0.0
    %743 = vmatprep.subr.mxu0 0.0
    %744 = vmatpush1.msra.mxu0 0.0
    %745 = vmatprep.subr.mxu0 0.0
    %746 = vmatpush1.msra.mxu0 0.0
    %747 = vmatprep.subr.mxu0 0.0
    %748 = vmatpush1.msra.mxu0 0.0
    %749 = vmatprep.subr.mxu0 0.0
    %750 = vmatpush1.msra.mxu0 0.0
    %751 = vmatprep.subr.mxu0 0.0
    %752 = vmatpush1.msra.mxu0 0.0
    %753 = vmatprep.subr.mxu0 0.0
    %754 = vmatpush1.msra.mxu0 0.0
    %755 = vmatprep.subr.mxu0 0.0
    %756 = vmatpush1.msra.mxu0 0.0
    %757 = vmatprep.subr.mxu0 0.0
    %758 = vmatpush1.msra.mxu0 0.0
    %759 = vmatprep.subr.mxu0 0.0
    %760 = vmatpush1.msra.mxu0 0.0
    %761 = vmatprep.subr.mxu0 0.0
    %762 = vmatpush1.msra.mxu0 0.0
    %763 = vmatprep.mubr.f32.mxu0 0.0
    %764 = vmatmul.mubr.f32.gmra.mrb[0].mxu0 %v672
    %v765 = vpop.f32.mrb[0].mxu0
    %v766 = vadd.f32 %v697, %v765
    %v767 = vpop.f32.mrb[0].mxu0
    %768 = vmatprep.mubr.f32.mxu0 0.0
    %769 = vmatmul.mubr.f32.gmra.mrb[0].mxu0 %v673
    %v770 = vpop.f32.mrb[0].mxu0
    %v771 = vadd.f32 %v697, %v770
    %v772 = vpop.f32.mrb[0].mxu0
    %773 = vmatprep.mubr.f32.mxu0 0.0
    %774 = vmatmul.mubr.f32.gmra.mrb[0].mxu0 %v674
    %v775 = vpop.f32.mrb[0].mxu0
    %v776 = vadd.f32 %v697, %v775
    %v777 = vpop.f32.mrb[0].mxu0
    %778 = vmatprep.mubr.f32.mxu0 0.0
    %779 = vmatmul.mubr.f32.gmra.mrb[0].mxu0 %v675
    %v780 = vpop.f32.mrb[0].mxu0
    %v781 = vadd.f32 %v697, %v780
    %v782 = vpop.f32.mrb[0].mxu0
    %783 = vdwg.mxu0
    %v784 = vmul.f32 %v766, %v520
    %v785 = vmul.f32 %v771, %v525
    %786 = vadd.xlane.f32.xlu0 %v784
    %v787 = vpop.xlane.xlu0 %786
    %788 = vadd.xlane.f32.xlu0 %v785
    %v789 = vpop.xlane.xlu0 %788
    %v790 = vmul.f32 %v766, %v766
    %v791 = vmul.f32 %v771, %v771
    %792 = vadd.xlane.f32.xlu0 %v790
    %v793 = vpop.xlane.xlu0 %792
    %794 = vadd.xlane.f32.xlu0 %v791
    %v795 = vpop.xlane.xlu0 %794
    %v796 = vmul.f32 %v520, %v520
    %v797 = vmul.f32 %v525, %v525
    %798 = vadd.xlane.f32.xlu0 %v796
    %v799 = vpop.xlane.xlu0 %798
    %800 = vadd.xlane.f32.xlu0 %v797
    %v801 = vpop.xlane.xlu0 %800
    %v802 = vmax.f32 %v793, 1e-24
    %v803 = vmax.f32 %v795, 1e-24
    %v804 = vrsqrt.pop %v802
    %v805 = vrsqrt.pop %v803
    %v806 = vmul.f32 %v787, %v804
    %v807 = vmul.f32 %v789, %v805
    %v808 = vmax.f32 %v799, 1e-24
    %v809 = vmax.f32 %v801, 1e-24
    %v810 = vrsqrt.pop %v808
    %v811 = vrsqrt.pop %v809
    %v812 = vmul.f32 %v806, %v810
    %v813 = vmul.f32 %v807, %v811
    %v814 = vmul.f32 %v776, %v510
    %v815 = vmul.f32 %v781, %v515
    %816 = vadd.xlane.f32.xlu0 %v814
    %v817 = vpop.xlane.xlu0 %816
    %818 = vadd.xlane.f32.xlu0 %v815
    %v819 = vpop.xlane.xlu0 %818
    %v820 = vmul.f32 %v776, %v776
    %v821 = vmul.f32 %v781, %v781
    %822 = vadd.xlane.f32.xlu0 %v820
    %v823 = vpop.xlane.xlu0 %822
    %824 = vadd.xlane.f32.xlu0 %v821
    %v825 = vpop.xlane.xlu0 %824
    %v826 = vmul.f32 %v510, %v510
    %v827 = vmul.f32 %v515, %v515
    %828 = vadd.xlane.f32.xlu0 %v826
    %v829 = vpop.xlane.xlu0 %828
    %830 = vadd.xlane.f32.xlu0 %v827
    %v831 = vpop.xlane.xlu0 %830
    %v832 = vmax.f32 %v823, 1e-24
    %v833 = vmax.f32 %v825, 1e-24
    %v834 = vrsqrt.pop %v832
    %v835 = vrsqrt.pop %v833
    %v836 = vmul.f32 %v817, %v834
    %v837 = vmul.f32 %v819, %v835
    %v838 = vmax.f32 %v829, 1e-24
    %v839 = vmax.f32 %v831, 1e-24
    %v840 = vrsqrt.pop %v838
    %v841 = vrsqrt.pop %v839
    %v842 = vmul.f32 %v836, %v840
    %v843 = vmul.f32 %v837, %v841
    %v844 = vmul.f32 %v812, 2.0
    %v845 = vmul.f32 %v813, 2.0
    %v846 = vsub.f32 2.0, %v844
    %v847 = vsub.f32 2.0, %v845
    %v848 = vmul.f32 %v842, 2.0
    %v849 = vmul.f32 %v843, 2.0
    %v850 = vsub.f32 2.0, %v848
    %v851 = vsub.f32 2.0, %v849
    %v852 = vadd.f32 %v846, %v850
    %v853 = vadd.f32 %v847, %v851
    %vm854 = vcmask 7168
    %v855 = vsel %vm854, %v852, 0.0
    %v856 = vsel %vm854, %v853, 0.0
    %v857 = vadd.f32 %v855, %v856
    %858 = vadd.xlane.f32.xlu0 %v857
    %v859 = vpop.xlane.xlu0 %858
    %v860 = vrot.slane %v859, 4
    %v861 = vadd.f32 %v859, %v860
    %v862 = vrot.slane %v861, 2
    %v863 = vadd.f32 %v861, %v862
    %v864 = vrot.slane %v863, 1
    %v865 = vadd.f32 %v863, %v864
    %s866 = vtos %v865
    %v867 = vrcp.pop 16.0
    %s868 = vtos %v867
    %s869 = smul.f32 %s866, %s868
    %s870 = scalar_lea.smem [#allocation17], 0
    %871 = sst [smem:[%s870]] %s869
    // Predicated region
    $region86: #{tpu_custom_call.1} parent=1 // pred_check
      _
    $region87: #{tpu_custom_call.1} parent=1 // pred_check_branch
      %873 = sbr.rel (0) target = $region89
    $region88: #{tpu_custom_call.1} parent=1 // pred_region
      %s875 = ssub.s32 256, 256
      %876 = vsyncadd [#allocation5], %s875
      %s877 = sshll.u32 [#allocation16], 4
      %s878 = int_to_ptr.vmem [resolvable:$true] %s877
      %883 = dma.vmem_to_hbm [thread:$0]  %s878, 256, %s14, [#allocation5], 128, 128, 8
    $region89: #{tpu_custom_call.1} parent=1 // pred_fallthru
      _
    // Predicated region
    $region90: #{tpu_custom_call.1} parent=1 // pred_check
      _
    $region91: #{tpu_custom_call.1} parent=1 // pred_check_branch
      %885 = sbr.rel (0) target = $region93
    $region92: #{tpu_custom_call.1} parent=1 // pred_region
      %s887 = ssub.s32 16, 16
      %888 = vsyncadd [#allocation6], %s887
      %891 = dma.smem_to_hbm [#allocation17], 16, %s15, [#allocation6]
    $region93: #{tpu_custom_call.1} parent=1 // pred_fallthru
      _
    // Predicated region
    $region94: #{tpu_custom_call.1} parent=1 // pred_check
      _
    $region95: #{tpu_custom_call.1} parent=1 // pred_check_branch
      %893 = sbr.rel (0) target = $region97
    $region96: #{tpu_custom_call.1} parent=1 // pred_region
      %894 = dma.done [#allocation5], 256
    $region97: #{tpu_custom_call.1} parent=1 // pred_fallthru
      _
    // Predicated region
    $region98: #{tpu_custom_call.1} parent=1 // pred_check
      _
    $region99: #{tpu_custom_call.1} parent=1 // pred_check_branch
      %896 = sbr.rel (0) target = $region101
    $region100: #{tpu_custom_call.1} parent=1 // pred_region
      %897 = dma.done [#allocation6], 16
    $region101: #{tpu_custom_call.1} parent=1 // pred_fallthru
      _
    %898 = sfence
    %899 = vsyncpa [#allocation4], 1
    %900 = vsyncpa [#allocation8], 1
    %901 = vsyncpa [#allocation11], 1
    %902 = vsyncpa [#allocation14], 1
    %903 = vsyncpa [#allocation5], 1
    %904 = vsyncpa [#allocation6], 1

</llo_original>
